<compile_context>
chip_gen: v6e
topology: v6e:2x2x1
jax: 0.10.0
libtpu: 0.0.40
codegen_flags: <defaults>
</compile_context>

<pallas_src>
import math

import jax
import jax.numpy as jnp
from jax.experimental import pallas as pl
from jax.experimental.pallas import tpu as pltpu


# ---------------------------------------------------------------------------
# Kernel
# ---------------------------------------------------------------------------
def _make_embedder_kernel(eps, in_size, out_size, k_chunk, parts_per_step,
                          n_k, matmul_precision):
    k_tiled = n_k > 1

    def kernel(x_ref, w_ref, gamma_ref, beta_ref, o_ref, acc_ref):
        # x_ref:     (B, pp*I)        resident across the K axis (same block index)
        # w_ref:     (pp, k_chunk, O) weight tile for this (parts-group, K) step
        # gamma_ref: (1, pp*O)        BatchNorm1d weight slab (f32)
        # beta_ref:  (1, pp*O)        BatchNorm1d bias slab (f32)
        # o_ref:     (B, pp*O)        lane-dense output slab (written on last K step)
        # acc_ref:   (B, pp*O) f32    VMEM accumulator scratch
        k = pl.program_id(1)

        @pl.when(k == 0)
        def _init():
            acc_ref[...] = jnp.zeros_like(acc_ref)

        # Static unroll over the fused parts (see module docstring for rationale).
        for p in range(parts_per_step):
            if k_tiled:
                # K-tiled path: k_chunk and in_size are multiples of 128, so the
                # dynamic lane-dim start is guaranteed 128-aligned.
                x_start = pl.multiple_of(p * in_size + k * k_chunk, 128)
                xp = x_ref[:, pl.ds(x_start, k_chunk)]                # (B, k_chunk)
            else:
                xp = x_ref[:, p * in_size:(p + 1) * in_size]          # (B, I)
            y = jnp.dot(xp, w_ref[p],
                        preferred_element_type=jnp.float32,
                        precision=matmul_precision)                   # (B, O) f32
            acc_ref[:, p * out_size:(p + 1) * out_size] += y

        @pl.when(k == n_k - 1)
        def _finalize():
            y = acc_ref[...]
            # Training-mode BatchNorm1d: per-feature batch stats, biased variance.
            # Two-pass form (mean, then centered square) kept for numerical
            # stability (one-pass E[y^2]-mean^2 was considered and rejected).
            mean = jnp.mean(y, axis=0, keepdims=True)
            var = jnp.mean(jnp.square(y - mean), axis=0, keepdims=True)
            y = (y - mean) * jax.lax.rsqrt(var + eps)
            # Single lane-dense HBM store for the whole (B, pp*O) slab.
            o_ref[...] = (y * gamma_ref[...] + beta_ref[...]).astype(o_ref.dtype)

    return kernel


# ---------------------------------------------------------------------------
# Tiling / VMEM budgeting
# ---------------------------------------------------------------------------
def _vmem_targets():
    """Return (working-set budget, scoped-VMEM limit to request), in bytes."""
    phys = 128 << 20                      # v5e / v6e physical VMEM per TensorCore
    try:                                  # v7x reports a smaller (64 MiB) VMEM
        phys = int(pltpu.get_tpu_info().vmem_capacity_bytes)
    except Exception:
        pass
    limit = min(phys // 2, 48 << 20)      # leave headroom for the rest of the step
    budget = (limit * 3) // 4             # headroom for Mosaic-internal scratch
    return budget, limit


def _legal_parts_per_step(n_parts, input_size, output_size):
    """Divisors of n_parts whose x / out column slabs obey the lane rule."""
    pps = []
    for pp in range(1, n_parts + 1):
        if n_parts % pp:
            continue
        if pp == n_parts or ((pp * input_size) % 128 == 0
                             and (pp * output_size) % 128 == 0):
            pps.append(pp)
    return pps


def _legal_k_chunks(input_size):
    """K chunks that keep dynamic lane slices 128-aligned (or the full dim)."""
    chunks = {input_size}
    for d in range(128, input_size, 128):
        if input_size % d == 0:
            chunks.add(d)
    return sorted(chunks, reverse=True)   # fattest first


def _working_set_bytes(batch, pp, k_chunk, input_size, output_size,
                       x_item, w_item, out_item):
    """Full per-step VMEM working set, including BlockSpec double-buffering."""
    x_slab = 2 * batch * pp * input_size * x_item          # double-buffered input
    w_tile = 2 * pp * k_chunk * output_size * w_item       # double-buffered weight
    affine = 2 * 2 * pp * output_size * 4                  # gamma + beta slabs (f32)
    o_slab = 2 * batch * pp * output_size * out_item       # double-buffered output
    acc = batch * pp * output_size * 4                     # f32 accumulator scratch
    return x_slab + w_tile + affine + o_slab + acc


def _pick_tiling(batch, n_parts, input_size, output_size,
                 x_item, w_item, out_item, budget_bytes):
    """Pick (parts_per_step, k_chunk) fitting the VMEM budget; prefer >=2 grid
    steps on the parts axis (v7x has two TensorCores) and the fattest tiles."""
    pps = _legal_parts_per_step(n_parts, input_size, output_size)
    kcs = _legal_k_chunks(input_size)

    def best_k(pp):
        for kc in kcs:
            if _working_set_bytes(batch, pp, kc, input_size, output_size,
                                  x_item, w_item, out_item) <= budget_bytes:
                return kc
        return None

    if n_parts > 1:
        for pp in sorted((p for p in pps if n_parts // p >= 2), reverse=True):
            kc = best_k(pp)
            if kc is not None:
                return pp, kc
    for pp in sorted(pps, reverse=True):
        kc = best_k(pp)
        if kc is not None:
            return pp, kc
    # Nothing fits the budget: fall back to the smallest legal tile and let the
    # caller raise vmem_limit_bytes.  TODO(synk): batch-tiled BN for huge B.
    return min(pps), min(kcs)


# ---------------------------------------------------------------------------
# Wrapper
# ---------------------------------------------------------------------------
def embedder_forward(x, weight, gamma, beta, message_size, voc_size, *,
                     eps=1e-5, storage_dtype=None, out_dtype=None,
                     matmul_precision=None):
    """Embedder forward: PartMM -> BatchNorm1d (training-mode stats) -> view.

    x:      (B, n_parts * input_size)
    weight: (n_parts, input_size, output_size)   PartMM weight
    gamma:  (n_parts * output_size,)             BatchNorm1d weight
    beta:   (n_parts * output_size,)             BatchNorm1d bias
    storage_dtype:  optional (e.g. jnp.bfloat16) storage dtype for x / weight;
                    matmul accumulation and BatchNorm math stay f32.
    matmul_precision: forwarded to jnp.dot (e.g. lax.Precision.HIGHEST for a
                    bit-faithful f32 PartMM at ~3x MXU cost).
    Returns (B, message_size, voc_size); message_size*voc_size == n_parts*output_size.
    """
    n_parts, input_size, output_size = weight.shape
    B, feat = x.shape
    n_out = n_parts * output_size
    assert feat == n_parts * input_size
    assert message_size * voc_size == n_out
    assert gamma.shape == (n_out,) and beta.shape == (n_out,)

    if storage_dtype is not None:
        x = x.astype(storage_dtype)
        weight = weight.astype(storage_dtype)
    out_dtype = jnp.dtype(out_dtype if out_dtype is not None else x.dtype)

    gamma2d = gamma.astype(jnp.float32).reshape(1, n_out)
    beta2d = beta.astype(jnp.float32).reshape(1, n_out)

    budget, vmem_limit = _vmem_targets()
    pp, k_chunk = _pick_tiling(B, n_parts, input_size, output_size,
                               x.dtype.itemsize, weight.dtype.itemsize,
                               out_dtype.itemsize, budget)
    n_k = input_size // k_chunk
    grid = (n_parts // pp, n_k)
    ws = _working_set_bytes(B, pp, k_chunk, input_size, output_size,
                            x.dtype.itemsize, weight.dtype.itemsize,
                            out_dtype.itemsize)
    vmem_limit = int(max(vmem_limit, ws + (4 << 20)))

    bytes_accessed = (x.size * x.dtype.itemsize
                      + weight.size * weight.dtype.itemsize
                      + gamma2d.size * 4 + beta2d.size * 4
                      + B * n_out * out_dtype.itemsize)
    cost = pl.CostEstimate(
        flops=2 * B * n_parts * input_size * output_size + 8 * B * n_out,
        transcendentals=n_out,               # one rsqrt per output feature
        bytes_accessed=int(bytes_accessed),
    )

    kernel = _make_embedder_kernel(eps, input_size, output_size, k_chunk, pp,
                                   n_k, matmul_precision)

    out2d = pl.pallas_call(
        kernel,
        out_shape=jax.ShapeDtypeStruct((B, n_out), out_dtype),
        grid_spec=pltpu.PrefetchScalarGridSpec(
            num_scalar_prefetch=0,
            grid=grid,
            in_specs=[
                pl.BlockSpec((B, pp * input_size), lambda g, k: (0, g)),
                pl.BlockSpec((pp, k_chunk, output_size), lambda g, k: (g, k, 0)),
                pl.BlockSpec((1, pp * output_size), lambda g, k: (0, g)),
                pl.BlockSpec((1, pp * output_size), lambda g, k: (0, g)),
            ],
            out_specs=pl.BlockSpec((B, pp * output_size), lambda g, k: (0, g)),
            scratch_shapes=[pltpu.VMEM((B, pp * output_size), jnp.float32)],
        ),
        compiler_params=pltpu.CompilerParams(
            dimension_semantics=("parallel", "arbitrary"),
            vmem_limit_bytes=vmem_limit,
        ),
        cost_estimate=cost,
    )(x, weight, gamma2d, beta2d)

    return out2d.reshape(B, message_size, voc_size)


def init_partmm_weight(key, n_parts, input_size, output_size, dtype=jnp.float32):
    # torch.nn.init.kaiming_uniform_(a=sqrt(5)) on a (P, I, O) tensor:
    #   fan_in = I * O, gain = sqrt(2 / (1 + 5)) = sqrt(1/3)
    #   bound  = sqrt(3) * gain / sqrt(fan_in) = 1 / sqrt(I * O)
    bound = 1.0 / math.sqrt(input_size * output_size)
    return jax.random.uniform(key, (n_parts, input_size, output_size),
                              dtype=dtype, minval=-bound, maxval=bound)


if __name__ == "__main__":
    # Embedder(features_dim=512, message_size=8, voc_size=64, n_parts=4)
    B = 8
    n_parts = 4
    features_dim = 512
    message_size = 8
    voc_size = 64
    input_size = features_dim // n_parts                  # 128
    output_size = message_size * voc_size // n_parts      # 128
    eps = 1e-5

    key = jax.random.PRNGKey(0)
    kx, kw = jax.random.split(key)
    x = jax.random.normal(kx, (B, features_dim), dtype=jnp.float32)
    weight = init_partmm_weight(kw, n_parts, input_size, output_size)
    # BatchNorm1d defaults: weight = 1, bias = 0.
    gamma = jnp.ones((message_size * voc_size,), dtype=jnp.float32)
    beta = jnp.zeros((message_size * voc_size,), dtype=jnp.float32)

    # Pure-JAX reference (HIGHEST precision): same math as the PyTorch Embedder
    # forward in training mode.
    xp = jnp.transpose(x.reshape(B, n_parts, input_size), (1, 0, 2))
    y = jnp.einsum("pbi,pio->pbo", xp, weight,
                   precision=jax.lax.Precision.HIGHEST)
    y = jnp.transpose(y, (1, 0, 2)).reshape(B, n_parts * output_size)
    mean = y.mean(axis=0, keepdims=True)
    var = jnp.mean(jnp.square(y - mean), axis=0, keepdims=True)
    ref = (y - mean) * jax.lax.rsqrt(var + eps) * gamma + beta
    ref = ref.reshape(B, message_size, voc_size)

    # f32 storage path (default MXU precision; tolerance absorbs bf16 rounding
    # inside the MXU vs the HIGHEST-precision reference — a logic bug is O(1)).
    out = embedder_forward(x, weight, gamma, beta, message_size, voc_size, eps=eps)
    jax.block_until_ready(out)
    assert out.shape == (B, message_size, voc_size)
    err = float(jnp.max(jnp.abs(out - ref)))
    assert jnp.allclose(out, ref, atol=2e-2, rtol=2e-2), f"f32 path max err {err}"

    # bf16 storage path (halves HBM weight streaming; f32 accumulation + BN math).
    out_bf16 = embedder_forward(x, weight, gamma, beta, message_size, voc_size,
                                eps=eps, storage_dtype=jnp.bfloat16,
                                out_dtype=jnp.float32)
    jax.block_until_ready(out_bf16)
    err_bf16 = float(jnp.max(jnp.abs(out_bf16 - ref)))
    assert jnp.allclose(out_bf16, ref, atol=7e-2, rtol=7e-2), \
        f"bf16 path max err {err_bf16}"

    print("KERNEL_OK")
</pallas_src>

<mosaic_0001>
module attributes {stable_mosaic.version = 11 : i64} {
  func.func @kernel(%arg0: i32, %arg1: i32, %arg2: memref<8x256xf32, #tpu.memory_space<vmem>>, %arg3: memref<2x128x128xf32, #tpu.memory_space<vmem>>, %arg4: memref<1x256xf32, #tpu.memory_space<vmem>>, %arg5: memref<1x256xf32, #tpu.memory_space<vmem>>, %arg6: memref<8x256xf32, #tpu.memory_space<vmem>>, %arg7: memref<8x256xf32, #tpu.memory_space<vmem>>) attributes {dimension_semantics = [#tpu.dimension_semantics<parallel>, #tpu.dimension_semantics<arbitrary>], iteration_bounds = array<i64: 2, 1>, scalar_prefetch = 0 : i64, scratch_operands = 1 : i64, tpu.core_type = #tpu.core_type<tc>, window_params = [{transform_indices = @transform_0, window_bounds = array<i64: 8, 256>}, {transform_indices = @transform_1, window_bounds = array<i64: 2, 128, 128>}, {transform_indices = @transform_2, window_bounds = array<i64: 1, 256>}, {transform_indices = @transform_3, window_bounds = array<i64: 1, 256>}, {transform_indices = @transform_4, window_bounds = array<i64: 8, 256>}]} {
    %c0_i32 = arith.constant 0 : i32
    %0 = arith.cmpi eq, %arg1, %c0_i32 : i32
    %1 = arith.extui %0 : i1 to i32
    %c0_i32_0 = arith.constant 0 : i32
    %2 = arith.cmpi ne, %1, %c0_i32_0 : i32
    scf.if %2 {
      %cst_19 = arith.constant 0.000000e+00 : f32
      %20 = vector.broadcast %cst_19 : f32 to vector<8x256xf32>
      %c0_20 = arith.constant 0 : index
      %c0_21 = arith.constant 0 : index
      %21 = vector.load %arg7[%c0_20, %c0_21] : memref<8x256xf32, #tpu.memory_space<vmem>>, vector<8x256xf32>
      tpu.vector_store %arg7[%c0_20, %c0_21], %20 {strides = array<i32>} : memref<8x256xf32, #tpu.memory_space<vmem>>, vector<8x256xf32>,
    } else {
    }
    %c0 = arith.constant 0 : index
    %c0_1 = arith.constant 0 : index
    %3 = vector.load %arg2[%c0, %c0_1] : memref<8x256xf32, #tpu.memory_space<vmem>>, vector<8x128xf32>
    %c0_2 = arith.constant 0 : index
    %c0_3 = arith.constant 0 : index
    %c0_4 = arith.constant 0 : index
    %4 = vector.load %arg3[%c0_2, %c0_3, %c0_4] : memref<2x128x128xf32, #tpu.memory_space<vmem>>, vector<1x128x128xf32>
    %5 = vector.shape_cast %4 : vector<1x128x128xf32> to vector<128x128xf32>
    %cst = arith.constant dense<0.000000e+00> : vector<8x128xf32>
    %6 = tpu.matmul %3, %5, %cst {dimension_numbers = #tpu.dot_dimension_numbers<[1], [0], [0], [1], [0, 0, 1, 1], [], []>} : vector<8x128xf32>, vector<128x128xf32>, vector<8x128xf32> -> vector<8x128xf32>
    %c0_5 = arith.constant 0 : index
    %c0_6 = arith.constant 0 : index
    %7 = vector.load %arg7[%c0_5, %c0_6] : memref<8x256xf32, #tpu.memory_space<vmem>>, vector<8x128xf32>
    %8 = arith.addf %7, %6 : vector<8x128xf32>
    %c0_7 = arith.constant 0 : index
    %c0_8 = arith.constant 0 : index
    %9 = vector.load %arg7[%c0_7, %c0_8] : memref<8x256xf32, #tpu.memory_space<vmem>>, vector<8x128xf32>
    tpu.vector_store %arg7[%c0_7, %c0_8], %8 {strides = array<i32>} : memref<8x256xf32, #tpu.memory_space<vmem>>, vector<8x128xf32>,
    %c0_9 = arith.constant 0 : index
    %c128 = arith.constant 128 : index
    %10 = vector.load %arg2[%c0_9, %c128] : memref<8x256xf32, #tpu.memory_space<vmem>>, vector<8x128xf32>
    %c1 = arith.constant 1 : index
    %c0_10 = arith.constant 0 : index
    %c0_11 = arith.constant 0 : index
    %11 = vector.load %arg3[%c1, %c0_10, %c0_11] : memref<2x128x128xf32, #tpu.memory_space<vmem>>, vector<1x128x128xf32>
    %12 = vector.shape_cast %11 : vector<1x128x128xf32> to vector<128x128xf32>
    %cst_12 = arith.constant dense<0.000000e+00> : vector<8x128xf32>
    %13 = tpu.matmul %10, %12, %cst_12 {dimension_numbers = #tpu.dot_dimension_numbers<[1], [0], [0], [1], [0, 0, 1, 1], [], []>} : vector<8x128xf32>, vector<128x128xf32>, vector<8x128xf32> -> vector<8x128xf32>
    %c0_13 = arith.constant 0 : index
    %c128_14 = arith.constant 128 : index
    %14 = vector.load %arg7[%c0_13, %c128_14] : memref<8x256xf32, #tpu.memory_space<vmem>>, vector<8x128xf32>
    %15 = arith.addf %14, %13 : vector<8x128xf32>
    %c0_15 = arith.constant 0 : index
    %c128_16 = arith.constant 128 : index
    %16 = vector.load %arg7[%c0_15, %c128_16] : memref<8x256xf32, #tpu.memory_space<vmem>>, vector<8x128xf32>
    tpu.vector_store %arg7[%c0_15, %c128_16], %15 {strides = array<i32>} : memref<8x256xf32, #tpu.memory_space<vmem>>, vector<8x128xf32>,
    %c0_i32_17 = arith.constant 0 : i32
    %17 = arith.cmpi eq, %arg1, %c0_i32_17 : i32
    %18 = arith.extui %17 : i1 to i32
    %c0_i32_18 = arith.constant 0 : i32
    %19 = arith.cmpi ne, %18, %c0_i32_18 : i32
    scf.if %19 {
      %c0_19 = arith.constant 0 : index
      %c0_20 = arith.constant 0 : index
      %20 = vector.load %arg7[%c0_19, %c0_20] : memref<8x256xf32, #tpu.memory_space<vmem>>, vector<8x256xf32>
      %cst_21 = arith.constant dense<0.000000e+00> : vector<256xf32>
      %21 = vector.multi_reduction <add>, %20, %cst_21 [0] : vector<8x256xf32> to vector<256xf32>
      %22 = vector.shape_cast %21 : vector<256xf32> to vector<1x256xf32>
      %cst_22 = arith.constant 8.000000e+00 : f32
      %23 = vector.broadcast %cst_22 : f32 to vector<1x256xf32>
      %24 = arith.divf %22, %23 : vector<1x256xf32>
      %25 = vector.broadcast %24 : vector<1x256xf32> to vector<8x256xf32>
      %26 = arith.subf %20, %25 : vector<8x256xf32>
      %27 = arith.mulf %26, %26 : vector<8x256xf32>
      %cst_23 = arith.constant dense<0.000000e+00> : vector<256xf32>
      %28 = vector.multi_reduction <add>, %27, %cst_23 [0] : vector<8x256xf32> to vector<256xf32>
      %29 = vector.shape_cast %28 : vector<256xf32> to vector<1x256xf32>
      %cst_24 = arith.constant 8.000000e+00 : f32
      %30 = vector.broadcast %cst_24 : f32 to vector<1x256xf32>
      %31 = arith.divf %29, %30 : vector<1x256xf32>
      %32 = vector.broadcast %24 : vector<1x256xf32> to vector<8x256xf32>
      %33 = arith.subf %20, %32 : vector<8x256xf32>
      %cst_25 = arith.constant 9.99999974E-6 : f32
      %34 = vector.broadcast %cst_25 : f32 to vector<1x256xf32>
      %35 = arith.addf %31, %34 : vector<1x256xf32>
      %36 = math.rsqrt %35 : vector<1x256xf32>
      %37 = vector.broadcast %36 : vector<1x256xf32> to vector<8x256xf32>
      %38 = arith.mulf %33, %37 : vector<8x256xf32>
      %c0_26 = arith.constant 0 : index
      %c0_27 = arith.constant 0 : index
      %39 = vector.load %arg4[%c0_26, %c0_27] : memref<1x256xf32, #tpu.memory_space<vmem>>, vector<1x256xf32>
      %40 = vector.broadcast %39 : vector<1x256xf32> to vector<8x256xf32>
      %41 = arith.mulf %38, %40 : vector<8x256xf32>
      %c0_28 = arith.constant 0 : index
      %c0_29 = arith.constant 0 : index
      %42 = vector.load %arg5[%c0_28, %c0_29] : memref<1x256xf32, #tpu.memory_space<vmem>>, vector<1x256xf32>
      %43 = vector.broadcast %42 : vector<1x256xf32> to vector<8x256xf32>
      %44 = arith.addf %41, %43 : vector<8x256xf32>
      %c0_30 = arith.constant 0 : index
      %c0_31 = arith.constant 0 : index
      %45 = vector.load %arg6[%c0_30, %c0_31] : memref<8x256xf32, #tpu.memory_space<vmem>>, vector<8x256xf32>
      tpu.vector_store %arg6[%c0_30, %c0_31], %44 {strides = array<i32>} : memref<8x256xf32, #tpu.memory_space<vmem>>, vector<8x256xf32>,
    } else {
    }
    return
  }
  func.func @transform_0(%arg0: i32, %arg1: i32) -> (i32, i32) {
    %c0_i32 = arith.constant 0 : i32
    %c0_i32_0 = arith.constant 0 : i32
    return %c0_i32, %arg0 : i32, i32
  }
  func.func @transform_1(%arg0: i32, %arg1: i32) -> (i32, i32, i32) {
    %c0_i32 = arith.constant 0 : i32
    %c0_i32_0 = arith.constant 0 : i32
    return %arg0, %arg1, %c0_i32 : i32, i32, i32
  }
  func.func @transform_2(%arg0: i32, %arg1: i32) -> (i32, i32) {
    %c0_i32 = arith.constant 0 : i32
    %c0_i32_0 = arith.constant 0 : i32
    return %c0_i32, %arg0 : i32, i32
  }
  func.func @transform_3(%arg0: i32, %arg1: i32) -> (i32, i32) {
    %c0_i32 = arith.constant 0 : i32
    %c0_i32_0 = arith.constant 0 : i32
    return %c0_i32, %arg0 : i32, i32
  }
  func.func @transform_4(%arg0: i32, %arg1: i32) -> (i32, i32) {
    %c0_i32 = arith.constant 0 : i32
    %c0_i32_0 = arith.constant 0 : i32
    return %c0_i32, %arg0 : i32, i32
  }
}

</mosaic_0001>

<llo_original>
// kernel: tpu_custom_call.1
$region0: #{tpu_custom_call.1}
  #allocation0 [shape = 'u32[]', space=smem, size = 0x4, offset = 0x4, fixed_abs, tag = 'smem constant byte address 0x4 - core index']
  #allocation1 [shape = 'u32[144,128]{1,0:T(1,128)}', space=vmem, size = 0x12000, scoped, tag = 'internal scratch']
  #allocation2 [shape = 'f32[8,256]{1,0:T(8,128)}', space=vmem, size = 0x2000, scoped, tag = 'scratch operand']
  %s0 = inlined_call_operand.hbm [shape: f32[8,512], index: 0, kind: input, shape index: {}]
  %s1 = inlined_call_operand.hbm [shape: f32[4,128,128], index: 1, kind: input, shape index: {}]
  %s2 = inlined_call_operand.hbm [shape: f32[1,512], index: 2, kind: input, shape index: {}]
  %s3 = inlined_call_operand.vmem [shape: f32[1,512], index: 3, kind: input, shape index: {}]
  %s4 = inlined_call_operand.hbm [shape: f32[8,512], index: 4, kind: output, shape index: {}]
  %s5 = sld [smem:[#allocation0]]
  $region69: #{tpu_custom_call.1} parent=0
    _
  %s7 = ssub.s32 1, %s5
  %s8 = scalar_select 0, %s7, %s5
  $region1: #{tpu_custom_call.1} parent=0
    #allocation3 [shape = 'u8[16384]{0}', space=vmem, size = 0x4000, scoped, tag = 'input window, operand 0']
    #allocation4 [shape = 's32[2]{0}', space=sflag, size = 0x8, scoped, tag = 'scoped memory for tpu_custom_call.1']
    #allocation5 [shape = 's32[2]{0}', space=sflag, size = 0x8, scoped, tag = 'scoped memory for tpu_custom_call.1']
    #allocation6 [shape = 'u8[262144]{0}', space=vmem, size = 0x40000, scoped, tag = 'input window, operand 1']
    #allocation7 [shape = 's32[2]{0}', space=sflag, size = 0x8, scoped, tag = 'scoped memory for tpu_custom_call.1']
    #allocation8 [shape = 'u8[2048]{0}', space=vmem, size = 0x800, scoped, tag = 'input window, operand 2']
    #allocation9 [shape = 'u8[16384]{0}', space=vmem, size = 0x4000, scoped, tag = 'output window, operand 0']
    %9 = vsyncpa [#allocation4], 0
    %s10 = scalar_lea.sflag [#allocation4], 1
    %11 = vsyncpa %s10, 0
    %12 = vsyncpa [#allocation7], 0
    %s13 = scalar_lea.sflag [#allocation7], 1
    %14 = vsyncpa %s13, 0
    %15 = vsyncpa [#allocation5], 0
    %s16 = scalar_lea.sflag [#allocation5], 1
    %17 = vsyncpa %s16, 0
    loop: start=0, step=1, limit=4
    $region2: #{tpu_custom_call.1} parent=1 // loop_pre_header
      _
    $region3: #{tpu_custom_call.1} parent=1 // loop_header
      %s19 = sphi 0, %s23
      %p20 = scmp.ge.s32.totalorder %s19, 4
      %s26 = sphi 0, %s38
      %s27 = sphi 0, %s34
      %s28 = sphi 0, %s26
      %s29 = sphi 0, %s27
      %s30 = sphi 0, %s28
      %s31 = sphi 0, %s29
      %s41 = sphi 0, %s43
      %s44 = sphi 0, %s41
      %s45 = sphi 0, %s44
      %s61 = sphi 0, %s45
      %s69 = sphi 0, %s71
      %s72 = sphi 0, %s69
      %s73 = sphi 0, %s72
      %s89 = sphi 0, %s73
      %s95 = sphi 0, %s97
      %s98 = sphi 0, %s95
      %s99 = sphi 0, %s98
      %s115 = sphi 0, %s99
      %s121 = sphi 0, %s123
      %s124 = sphi 0, %s121
      %s125 = sphi 0, %s124
      %s141 = sphi 0, %s125
      %s147 = sphi 0, %s149
      %s150 = sphi 0, %s147
      %s151 = sphi 0, %s150
      %s167 = sphi 0, %s151
    $region4: #{tpu_custom_call.1} parent=1 // loop_header_branch
      %22 = sbr.rel (%p20) target = $region8
    $region5: #{tpu_custom_call.1} parent=1 // loop_body
      %s24 = ssub.s32 %s19, 1
      %s25 = ssub.s32 %s19, 2
      %s32 = sadd.s32 1, %s27
      %p33 = scmp.ge.s32.totalorder %s32, 1
      %s34 = scalar_select %p33, 0, %s32
      %s35 = sadd.s32 1, %s26
      %s36 = scalar_select %p33, %s35, %s26
      %p37 = scmp.ge.s32.totalorder %s36, 2
      %s38 = scalar_select %p37, 0, %s36
      %s39 = ssub.s32 %s26, %s38
      %p40 = scmp.eq.s32.totalorder %s39, 0
      %s42 = sadd.s32 %s41, 1
      %s43 = scalar_select %p40, %s41, %s42
      %p46 = pneg %p40
      %p47 = scmp.eq.s32.totalorder %s19, 1
      %p48 = por %p46, %p47
      %p49 = scmp.ne.s32.totalorder %s41, %s44
      %p50 = scmp.eq.s32.totalorder %s19, 0
      %p51 = por %p49, %p50
      %p52 = scmp.ne.s32.totalorder %s41, %s44
      %p53 = scmp.eq.s32.totalorder %s24, 1
      %p54 = por %p52, %p53
      %p55 = scmp.ne.s32.totalorder %s44, %s45
      %p56 = scmp.eq.s32.totalorder %s24, 0
      %p57 = por %p55, %p56
      %p58 = scmp.ne.s32.totalorder %s44, %s45
      %p59 = scmp.eq.s32.totalorder %s25, 1
      %p60 = por %p58, %p59
      %p62 = scmp.ne.s32.totalorder %s45, %s61
      %p63 = scmp.eq.s32.totalorder %s25, 0
      %p64 = por %p62, %p63
      %s65 = ssub.s32 %s26, %s38
      %s66 = ssub.s32 %s27, %s34
      %s67 = sor.u32 %s65, %s66
      %p68 = scmp.eq.s32.totalorder %s67, 0
      %s70 = sadd.s32 %s69, 1
      %s71 = scalar_select %p68, %s69, %s70
      %p74 = pneg %p68
      %p75 = scmp.eq.s32.totalorder %s19, 1
      %p76 = por %p74, %p75
      %p77 = scmp.ne.s32.totalorder %s69, %s72
      %p78 = scmp.eq.s32.totalorder %s19, 0
      %p79 = por %p77, %p78
      %p80 = scmp.ne.s32.totalorder %s69, %s72
      %p81 = scmp.eq.s32.totalorder %s24, 1
      %p82 = por %p80, %p81
      %p83 = scmp.ne.s32.totalorder %s72, %s73
      %p84 = scmp.eq.s32.totalorder %s24, 0
      %p85 = por %p83, %p84
      %p86 = scmp.ne.s32.totalorder %s72, %s73
      %p87 = scmp.eq.s32.totalorder %s25, 1
      %p88 = por %p86, %p87
      %p90 = scmp.ne.s32.totalorder %s73, %s89
      %p91 = scmp.eq.s32.totalorder %s25, 0
      %p92 = por %p90, %p91
      %s93 = ssub.s32 %s26, %s38
      %p94 = scmp.eq.s32.totalorder %s93, 0
      %s96 = sadd.s32 %s95, 1
      %s97 = scalar_select %p94, %s95, %s96
      %p100 = pneg %p94
      %p101 = scmp.eq.s32.totalorder %s19, 1
      %p102 = por %p100, %p101
      %p103 = scmp.ne.s32.totalorder %s95, %s98
      %p104 = scmp.eq.s32.totalorder %s19, 0
      %p105 = por %p103, %p104
      %p106 = scmp.ne.s32.totalorder %s95, %s98
      %p107 = scmp.eq.s32.totalorder %s24, 1
      %p108 = por %p106, %p107
      %p109 = scmp.ne.s32.totalorder %s98, %s99
      %p110 = scmp.eq.s32.totalorder %s24, 0
      %p111 = por %p109, %p110
      %p112 = scmp.ne.s32.totalorder %s98, %s99
      %p113 = scmp.eq.s32.totalorder %s25, 1
      %p114 = por %p112, %p113
      %p116 = scmp.ne.s32.totalorder %s99, %s115
      %p117 = scmp.eq.s32.totalorder %s25, 0
      %p118 = por %p116, %p117
      %s119 = ssub.s32 %s26, %s38
      %p120 = scmp.eq.s32.totalorder %s119, 0
      %s122 = sadd.s32 %s121, 1
      %s123 = scalar_select %p120, %s121, %s122
      %p126 = pneg %p120
      %p127 = scmp.eq.s32.totalorder %s19, 1
      %p128 = por %p126, %p127
      %p129 = scmp.ne.s32.totalorder %s121, %s124
      %p130 = scmp.eq.s32.totalorder %s19, 0
      %p131 = por %p129, %p130
      %p132 = scmp.ne.s32.totalorder %s121, %s124
      %p133 = scmp.eq.s32.totalorder %s24, 1
      %p134 = por %p132, %p133
      %p135 = scmp.ne.s32.totalorder %s124, %s125
      %p136 = scmp.eq.s32.totalorder %s24, 0
      %p137 = por %p135, %p136
      %p138 = scmp.ne.s32.totalorder %s124, %s125
      %p139 = scmp.eq.s32.totalorder %s25, 1
      %p140 = por %p138, %p139
      %p142 = scmp.ne.s32.totalorder %s125, %s141
      %p143 = scmp.eq.s32.totalorder %s25, 0
      %p144 = por %p142, %p143
      %s145 = ssub.s32 %s26, %s38
      %p146 = scmp.eq.s32.totalorder %s145, 0
      %s148 = sadd.s32 %s147, 1
      %s149 = scalar_select %p146, %s147, %s148
      %p152 = pneg %p146
      %p153 = scmp.eq.s32.totalorder %s19, 1
      %p154 = por %p152, %p153
      %p155 = scmp.ne.s32.totalorder %s147, %s150
      %p156 = scmp.eq.s32.totalorder %s19, 0
      %p157 = por %p155, %p156
      %p158 = scmp.ne.s32.totalorder %s147, %s150
      %p159 = scmp.eq.s32.totalorder %s24, 1
      %p160 = por %p158, %p159
      %p161 = scmp.ne.s32.totalorder %s150, %s151
      %p162 = scmp.eq.s32.totalorder %s24, 0
      %p163 = por %p161, %p162
      %p164 = scmp.ne.s32.totalorder %s150, %s151
      %p165 = scmp.eq.s32.totalorder %s25, 1
      %p166 = por %p164, %p165
      %p168 = scmp.ne.s32.totalorder %s151, %s167
      %p169 = scmp.eq.s32.totalorder %s25, 0
      %p170 = por %p168, %p169
      %p171 = scmp.le.s32.totalorder 1, %s19
      %p172 = scmp.lt.s32.totalorder %s19, 3
      %p173 = pnand %p171, %p172
      %p174 = pneg %p173
      // Predicated region
      $region9: #{tpu_custom_call.1} parent=5 // pred_check
        _
      $region10: #{tpu_custom_call.1} parent=5 // pred_check_branch
        %176 = sbr.rel (%p173) target = $region12
      $region11: #{tpu_custom_call.1} parent=5 // pred_region
        %s177 = ssub.s32 %s19, 1
      $region12: #{tpu_custom_call.1} parent=5 // pred_fallthru
        _
      %p178 = scmp.lt.s32.totalorder %s19, 2
      // Predicated region
      $region13: #{tpu_custom_call.1} parent=5 // pred_check
        %p179 = pneg %p178
      $region14: #{tpu_custom_call.1} parent=5 // pred_check_branch
        %181 = sbr.rel (%p179) target = $region16
      $region15: #{tpu_custom_call.1} parent=5 // pred_region
        // Predicated region
        $region17: #{tpu_custom_call.1} parent=15 // pred_check
          %p182 = pneg %p51
        $region18: #{tpu_custom_call.1} parent=15 // pred_check_branch
          %184 = sbr.rel (%p182) target = $region20
        $region19: #{tpu_custom_call.1} parent=15 // pred_region
          %s185 = sand.u32 %s41, 1
          %s186 = scalar_lea.sflag [#allocation4], %s185
          %s187 = sand.u32 %s41, 1
          %s188 = smul.addr %s187, 16
          %s189 = scalar_lea.vmem [#allocation3], %s188
          %s190 = smul.u32 2, %s26
          %s192 = ssub.s32 256, 256
          %193 = vsyncadd %s186, %s192
          %s194 = smul.addr %s190, 128
          %s195 = scalar_lea.hbm %s0, %s194
          %s197 = sshll.u32 %s189, 4
          %s198 = int_to_ptr.vmem [resolvable:$true] %s197
          %200 = dma.hbm_to_vmem [thread:$0]  %s195, 256, %s198, %s186
        $region20: #{tpu_custom_call.1} parent=15 // pred_fallthru
          _
        // Predicated region
        $region21: #{tpu_custom_call.1} parent=15 // pred_check
          %p201 = pneg %p79
        $region22: #{tpu_custom_call.1} parent=15 // pred_check_branch
          %203 = sbr.rel (%p201) target = $region24
        $region23: #{tpu_custom_call.1} parent=15 // pred_region
          %s204 = sand.u32 %s19, 1
          %s205 = scalar_lea.sflag [#allocation7], %s204
          %s206 = sand.u32 %s69, 1
          %s207 = smul.addr %s206, 256
          %s208 = scalar_lea.vmem [#allocation6], %s207
          %s209 = smul.u32 2, %s26
          %s210 = smul.u32 16, %s27
          %s212 = ssub.s32 4096, 4096
          %213 = vsyncadd %s205, %s212
          %s214 = smul.addr %s209, 16
          %s215 = sadd.s32 %s210, %s214
          %s216 = smul.addr %s215, 128
          %s217 = scalar_lea.hbm %s1, %s216
          %s218 = sshll.u32 %s208, 4
          %s219 = int_to_ptr.vmem [resolvable:$true] %s218
          %224 = dma.hbm_to_vmem [thread:$0]  %s217, 4096, %s219, %s205, 128, 128, 8
        $region24: #{tpu_custom_call.1} parent=15 // pred_fallthru
          _
        // Predicated region
        $region25: #{tpu_custom_call.1} parent=15 // pred_check
          %p225 = pneg %p105
        $region26: #{tpu_custom_call.1} parent=15 // pred_check_branch
          %227 = sbr.rel (%p225) target = $region28
        $region27: #{tpu_custom_call.1} parent=15 // pred_region
          %s228 = sand.u32 %s19, 1
          %s229 = scalar_lea.sflag [#allocation7], %s228
          %s230 = sand.u32 %s95, 1
          %s231 = smul.addr %s230, 2
          %s232 = scalar_lea.vmem [#allocation8], %s231
          %s233 = smul.u32 2, %s26
          %s235 = ssub.s32 32, 32
          %236 = vsyncadd %s229, %s235
          %s237 = smul.addr %s233, 16
          %s238 = scalar_lea.hbm %s2, %s237
          %s240 = sshll.u32 %s232, 4
          %s241 = int_to_ptr.vmem [resolvable:$true] %s240
          %243 = dma.hbm_to_vmem [thread:$0]  %s238, 32, %s241, %s229
        $region28: #{tpu_custom_call.1} parent=15 // pred_fallthru
          _
        // Predicated region
        $region29: #{tpu_custom_call.1} parent=15 // pred_check
          %p244 = pneg %p131
        $region30: #{tpu_custom_call.1} parent=15 // pred_check_branch
          %246 = sbr.rel (%p244) target = $region32
        $region31: #{tpu_custom_call.1} parent=15 // pred_region
          %s247 = smul.u32 2, %s26
          %p248 = scmp.lt.s32.totalorder %s247, 3
          %s249 = scalar_select %p248, %s247, 3
          %s250 = scalar_lea.vmem %s3, %s249
          %s251 = smul.u32 2, %s26
        $region32: #{tpu_custom_call.1} parent=15 // pred_fallthru
          _
      $region16: #{tpu_custom_call.1} parent=5 // pred_fallthru
        _
      %p252 = scmp.le.s32.totalorder 1, %s19
      %p253 = scmp.lt.s32.totalorder %s19, 3
      %p254 = pnand %p252, %p253
      %p255 = pneg %p254
      // Predicated region
      $region33: #{tpu_custom_call.1} parent=5 // pred_check
        _
      $region34: #{tpu_custom_call.1} parent=5 // pred_check_branch
        %257 = sbr.rel (%p254) target = $region36
      $region35: #{tpu_custom_call.1} parent=5 // pred_region
        %s258 = ssub.s32 %s19, 1
        %s259 = sand.u32 %s44, 1
        %s260 = scalar_lea.sflag [#allocation4], %s259
        %s261 = sand.u32 %s44, 1
        %s262 = smul.addr %s261, 16
        %s263 = scalar_lea.vmem [#allocation3], %s262
        // Predicated region
        $region37: #{tpu_custom_call.1} parent=35 // pred_check
          %p264 = pneg %p57
        $region38: #{tpu_custom_call.1} parent=35 // pred_check_branch
          %266 = sbr.rel (%p264) target = $region40
        $region39: #{tpu_custom_call.1} parent=35 // pred_region
          %267 = dma.done %s260, 256
        $region40: #{tpu_custom_call.1} parent=35 // pred_fallthru
          _
        %s268 = sand.u32 %s24, 1
        %s269 = scalar_lea.sflag [#allocation7], %s268
        %s270 = sand.u32 %s72, 1
        %s271 = smul.addr %s270, 256
        %s272 = scalar_lea.vmem [#allocation6], %s271
        // Predicated region
        $region41: #{tpu_custom_call.1} parent=35 // pred_check
          %p273 = pneg %p85
        $region42: #{tpu_custom_call.1} parent=35 // pred_check_branch
          %275 = sbr.rel (%p273) target = $region44
        $region43: #{tpu_custom_call.1} parent=35 // pred_region
          %276 = dma.done %s269, 4096
        $region44: #{tpu_custom_call.1} parent=35 // pred_fallthru
          _
        %s277 = sand.u32 %s24, 1
        %s278 = scalar_lea.sflag [#allocation7], %s277
        %s279 = sand.u32 %s98, 1
        %s280 = smul.addr %s279, 2
        %s281 = scalar_lea.vmem [#allocation8], %s280
        // Predicated region
        $region45: #{tpu_custom_call.1} parent=35 // pred_check
          %p282 = pneg %p111
        $region46: #{tpu_custom_call.1} parent=35 // pred_check_branch
          %284 = sbr.rel (%p282) target = $region48
        $region47: #{tpu_custom_call.1} parent=35 // pred_region
          %285 = dma.done %s278, 32
        $region48: #{tpu_custom_call.1} parent=35 // pred_fallthru
          _
        %s286 = sand.u32 %s44, 1
        %s287 = scalar_lea.sflag [#allocation4], %s286
        %s288 = sand.u32 %s44, 1
        %s289 = smul.addr %s288, 16
        %s290 = scalar_lea.vmem [#allocation3], %s289
        %p291 = pneg %p57
        %p292 = pneg %p54
        %s293 = sand.u32 %s24, 1
        %s294 = scalar_lea.sflag [#allocation7], %s293
        %s295 = sand.u32 %s72, 1
        %s296 = smul.addr %s295, 256
        %s297 = scalar_lea.vmem [#allocation6], %s296
        %p298 = pneg %p85
        %p299 = pneg %p82
        %s300 = sand.u32 %s24, 1
        %s301 = scalar_lea.sflag [#allocation7], %s300
        %s302 = sand.u32 %s98, 1
        %s303 = smul.addr %s302, 2
        %s304 = scalar_lea.vmem [#allocation8], %s303
        %p305 = pneg %p111
        %p306 = pneg %p108
        %s307 = smul.u32 2, %s28
        %p308 = scmp.lt.s32.totalorder %s307, 3
        %s309 = scalar_select %p308, %s307, 3
        %s310 = scalar_lea.vmem %s3, %s309
        %p311 = pneg %p137
        %p312 = pneg %p134
        %p313 = pneg %p163
        %p314 = pneg %p160
        %s315 = sand.u32 %s150, 1
        %s316 = scalar_lea.sflag [#allocation5], %s315
        %s317 = sand.u32 %s150, 1
        %s318 = smul.addr %s317, 16
        %s319 = scalar_lea.vmem [#allocation9], %s318
        %s320 = smul.u32 2, %s28
        %s321 = smul.u32 2, %s28
        %s322 = smul.u32 16, %s29
        %s323 = smul.u32 2, %s28
        %s324 = smul.u32 2, %s28
        %p325 = scmp.lt.s32.totalorder %s324, 3
        %s326 = scalar_select %p325, %s324, 3
        %s327 = scalar_lea.vmem %s3, %s326
        %s328 = smul.u32 2, %s28
        %s329 = smul.u32 2, %s28
        %p330 = scmp.eq.s32.totalorder %s29, 0
        // Predicated region
        $region49: #{tpu_custom_call.1} parent=35 // pred_check
          %p331 = pneg %p330
        $region50: #{tpu_custom_call.1} parent=35 // pred_check_branch
          %333 = sbr.rel (%p331) target = $region52
        $region51: #{tpu_custom_call.1} parent=35 // pred_region
          %334 = vst [vmem:[#allocation2] sm:$0xff] 0.0
          %335 = vst [vmem:[#allocation2 + $0x8] sm:$0xff] 0.0
        $region52: #{tpu_custom_call.1} parent=35 // pred_fallthru
          _
        %v336 = vld [vmem:[%s263] sm:$0xff]
        %v337 = vld [vmem:[%s272] sm:$0xff]
        %v338 = vld [vmem:[%s272 + $0x8] sm:$0xff]
        %v339 = vld [vmem:[%s272 + $0x10] sm:$0xff]
        %v340 = vld [vmem:[%s272 + $0x18] sm:$0xff]
        %v341 = vld [vmem:[%s272 + $0x20] sm:$0xff]
        %v342 = vld [vmem:[%s272 + $0x28] sm:$0xff]
        %v343 = vld [vmem:[%s272 + $0x30] sm:$0xff]
        %v344 = vld [vmem:[%s272 + $0x38] sm:$0xff]
        %v345 = vld [vmem:[%s272 + $0x40] sm:$0xff]
        %v346 = vld [vmem:[%s272 + $0x48] sm:$0xff]
        %v347 = vld [vmem:[%s272 + $0x50] sm:$0xff]
        %v348 = vld [vmem:[%s272 + $0x58] sm:$0xff]
        %v349 = vld [vmem:[%s272 + $0x60] sm:$0xff]
        %v350 = vld [vmem:[%s272 + $0x68] sm:$0xff]
        %v351 = vld [vmem:[%s272 + $0x70] sm:$0xff]
        %v352 = vld [vmem:[%s272 + $0x78] sm:$0xff]
        %353 = vmatprep.subr.mxu0 0.0
        %354 = vmatpush1.msra.mxu0 %v352
        %355 = vmatprep.subr.mxu0 0.0
        %356 = vmatpush1.msra.mxu0 %v351
        %357 = vmatprep.subr.mxu0 0.0
        %358 = vmatpush1.msra.mxu0 %v350
        %359 = vmatprep.subr.mxu0 0.0
        %360 = vmatpush1.msra.mxu0 %v349
        %361 = vmatprep.subr.mxu0 0.0
        %362 = vmatpush1.msra.mxu0 %v348
        %363 = vmatprep.subr.mxu0 0.0
        %364 = vmatpush1.msra.mxu0 %v347
        %365 = vmatprep.subr.mxu0 0.0
        %366 = vmatpush1.msra.mxu0 %v346
        %367 = vmatprep.subr.mxu0 0.0
        %368 = vmatpush1.msra.mxu0 %v345
        %369 = vmatprep.subr.mxu0 0.0
        %370 = vmatpush1.msra.mxu0 %v344
        %371 = vmatprep.subr.mxu0 0.0
        %372 = vmatpush1.msra.mxu0 %v343
        %373 = vmatprep.subr.mxu0 0.0
        %374 = vmatpush1.msra.mxu0 %v342
        %375 = vmatprep.subr.mxu0 0.0
        %376 = vmatpush1.msra.mxu0 %v341
        %377 = vmatprep.subr.mxu0 0.0
        %378 = vmatpush1.msra.mxu0 %v340
        %379 = vmatprep.subr.mxu0 0.0
        %380 = vmatpush1.msra.mxu0 %v339
        %381 = vmatprep.subr.mxu0 0.0
        %382 = vmatpush1.msra.mxu0 %v338
        %383 = vmatprep.subr.mxu0 0.0
        %384 = vmatpush1.msra.mxu0 %v337
        %385 = vmatprep.subr.mxu0 0.0
        %386 = vmatpush2.msra.mxu0 0.0
        %387 = vmatprep.subr.mxu0 0.0
        %388 = vmatpush2.msra.mxu0 0.0
        %389 = vmatprep.subr.mxu0 0.0
        %390 = vmatpush2.msra.mxu0 0.0
        %391 = vmatprep.subr.mxu0 0.0
        %392 = vmatpush2.msra.mxu0 0.0
        %393 = vmatprep.subr.mxu0 0.0
        %394 = vmatpush2.msra.mxu0 0.0
        %395 = vmatprep.subr.mxu0 0.0
        %396 = vmatpush2.msra.mxu0 0.0
        %397 = vmatprep.subr.mxu0 0.0
        %398 = vmatpush2.msra.mxu0 0.0
        %399 = vmatprep.subr.mxu0 0.0
        %400 = vmatpush2.msra.mxu0 0.0
        %401 = vmatprep.subr.mxu0 0.0
        %402 = vmatpush2.msra.mxu0 0.0
        %403 = vmatprep.subr.mxu0 0.0
        %404 = vmatpush2.msra.mxu0 0.0
        %405 = vmatprep.subr.mxu0 0.0
        %406 = vmatpush2.msra.mxu0 0.0
        %407 = vmatprep.subr.mxu0 0.0
        %408 = vmatpush2.msra.mxu0 0.0
        %409 = vmatprep.subr.mxu0 0.0
        %410 = vmatpush2.msra.mxu0 0.0
        %411 = vmatprep.subr.mxu0 0.0
        %412 = vmatpush2.msra.mxu0 0.0
        %413 = vmatprep.subr.mxu0 0.0
        %414 = vmatpush2.msra.mxu0 0.0
        %415 = vmatprep.subr.mxu0 0.0
        %416 = vmatpush2.msra.mxu0 0.0
        %417 = vmatprep.mubr.f32.mxu0 0.0
        %418 = vmatmul.mubr.f32.gmra.mxu0 %v336
        %v419 = vpop.f32.mrf.mxu0
        %v420 = vadd.f32 0.0, %v419
        %v421 = vpop.f32.mrf.mxu0
        %422 = vdwg.mxu0
        %v423 = vld [vmem:[#allocation2] sm:$0xff]
        %v424 = vadd.f32 %v423, %v420
        %425 = vst [vmem:[#allocation2] sm:$0xff] %v424
        %v426 = vld [vmem:[%s263 + $0x8] sm:$0xff]
        %s427 = scalar_lea.vmem %s272, 128 [#allocation6]
        %v428 = vld [vmem:[%s427] sm:$0xff]
        %v429 = vld [vmem:[%s427 + $0x8] sm:$0xff]
        %v430 = vld [vmem:[%s427 + $0x10] sm:$0xff]
        %v431 = vld [vmem:[%s427 + $0x18] sm:$0xff]
        %v432 = vld [vmem:[%s427 + $0x20] sm:$0xff]
        %v433 = vld [vmem:[%s427 + $0x28] sm:$0xff]
        %v434 = vld [vmem:[%s427 + $0x30] sm:$0xff]
        %v435 = vld [vmem:[%s427 + $0x38] sm:$0xff]
        %v436 = vld [vmem:[%s427 + $0x40] sm:$0xff]
        %v437 = vld [vmem:[%s427 + $0x48] sm:$0xff]
        %v438 = vld [vmem:[%s427 + $0x50] sm:$0xff]
        %v439 = vld [vmem:[%s427 + $0x58] sm:$0xff]
        %v440 = vld [vmem:[%s427 + $0x60] sm:$0xff]
        %v441 = vld [vmem:[%s427 + $0x68] sm:$0xff]
        %v442 = vld [vmem:[%s427 + $0x70] sm:$0xff]
        %v443 = vld [vmem:[%s427 + $0x78] sm:$0xff]
        %444 = vmatprep.subr.mxu0 0.0
        %445 = vmatpush1.msra.mxu0 %v443
        %446 = vmatprep.subr.mxu0 0.0
        %447 = vmatpush1.msra.mxu0 %v442
        %448 = vmatprep.subr.mxu0 0.0
        %449 = vmatpush1.msra.mxu0 %v441
        %450 = vmatprep.subr.mxu0 0.0
        %451 = vmatpush1.msra.mxu0 %v440
        %452 = vmatprep.subr.mxu0 0.0
        %453 = vmatpush1.msra.mxu0 %v439
        %454 = vmatprep.subr.mxu0 0.0
        %455 = vmatpush1.msra.mxu0 %v438
        %456 = vmatprep.subr.mxu0 0.0
        %457 = vmatpush1.msra.mxu0 %v437
        %458 = vmatprep.subr.mxu0 0.0
        %459 = vmatpush1.msra.mxu0 %v436
        %460 = vmatprep.subr.mxu0 0.0
        %461 = vmatpush1.msra.mxu0 %v435
        %462 = vmatprep.subr.mxu0 0.0
        %463 = vmatpush1.msra.mxu0 %v434
        %464 = vmatprep.subr.mxu0 0.0
        %465 = vmatpush1.msra.mxu0 %v433
        %466 = vmatprep.subr.mxu0 0.0
        %467 = vmatpush1.msra.mxu0 %v432
        %468 = vmatprep.subr.mxu0 0.0
        %469 = vmatpush1.msra.mxu0 %v431
        %470 = vmatprep.subr.mxu0 0.0
        %471 = vmatpush1.msra.mxu0 %v430
        %472 = vmatprep.subr.mxu0 0.0
        %473 = vmatpush1.msra.mxu0 %v429
        %474 = vmatprep.subr.mxu0 0.0
        %475 = vmatpush1.msra.mxu0 %v428
        %476 = vmatprep.subr.mxu0 0.0
        %477 = vmatpush2.msra.mxu0 0.0
        %478 = vmatprep.subr.mxu0 0.0
        %479 = vmatpush2.msra.mxu0 0.0
        %480 = vmatprep.subr.mxu0 0.0
        %481 = vmatpush2.msra.mxu0 0.0
        %482 = vmatprep.subr.mxu0 0.0
        %483 = vmatpush2.msra.mxu0 0.0
        %484 = vmatprep.subr.mxu0 0.0
        %485 = vmatpush2.msra.mxu0 0.0
        %486 = vmatprep.subr.mxu0 0.0
        %487 = vmatpush2.msra.mxu0 0.0
        %488 = vmatprep.subr.mxu0 0.0
        %489 = vmatpush2.msra.mxu0 0.0
        %490 = vmatprep.subr.mxu0 0.0
        %491 = vmatpush2.msra.mxu0 0.0
        %492 = vmatprep.subr.mxu0 0.0
        %493 = vmatpush2.msra.mxu0 0.0
        %494 = vmatprep.subr.mxu0 0.0
        %495 = vmatpush2.msra.mxu0 0.0
        %496 = vmatprep.subr.mxu0 0.0
        %497 = vmatpush2.msra.mxu0 0.0
        %498 = vmatprep.subr.mxu0 0.0
        %499 = vmatpush2.msra.mxu0 0.0
        %500 = vmatprep.subr.mxu0 0.0
        %501 = vmatpush2.msra.mxu0 0.0
        %502 = vmatprep.subr.mxu0 0.0
        %503 = vmatpush2.msra.mxu0 0.0
        %504 = vmatprep.subr.mxu0 0.0
        %505 = vmatpush2.msra.mxu0 0.0
        %506 = vmatprep.subr.mxu0 0.0
        %507 = vmatpush2.msra.mxu0 0.0
        %508 = vmatprep.mubr.f32.mxu0 0.0
        %509 = vmatmul.mubr.f32.gmra.mxu0 %v426
        %v510 = vpop.f32.mrf.mxu0
        %v511 = vadd.f32 0.0, %v510
        %v512 = vpop.f32.mrf.mxu0
        %513 = vdwg.mxu0
        %v514 = vld [vmem:[#allocation2 + $0x8] sm:$0xff]
        %v515 = vadd.f32 %v514, %v511
        %516 = vst [vmem:[#allocation2 + $0x8] sm:$0xff] %v515
        // Predicated region
        $region53: #{tpu_custom_call.1} parent=35 // pred_check
          %p517 = pneg %p330
        $region54: #{tpu_custom_call.1} parent=35 // pred_check_branch
          %519 = sbr.rel (%p517) target = $region56
        $region55: #{tpu_custom_call.1} parent=35 // pred_region
          %v520 = vld [vmem:[#allocation2] sm:$0xff]
          %v521 = vld [vmem:[#allocation2 + $0x8] sm:$0xff]
          %v522 = vrot.slane %v520, 4
          %v523 = vadd.f32 %v520, %v522
          %v524 = vrot.slane %v523, 2
          %v525 = vadd.f32 %v523, %v524
          %v526 = vrot.slane %v525, 1
          %v527 = vadd.f32 %v525, %v526
          %v528 = vrot.slane %v521, 4
          %v529 = vadd.f32 %v521, %v528
          %v530 = vrot.slane %v529, 2
          %v531 = vadd.f32 %v529, %v530
          %v532 = vrot.slane %v531, 1
          %v533 = vadd.f32 %v531, %v532
          %v534 = vrcp.pop 8.0
          %v535 = vmul.f32 %v527, %v534
          %v536 = vmul.f32 %v533, %v534
          %v537 = vsub.f32 %v520, %v535
          %v538 = vsub.f32 %v521, %v536
          %v539 = vmul.f32 %v537, %v537
          %v540 = vmul.f32 %v538, %v538
          %v541 = vrot.slane %v539, 4
          %v542 = vadd.f32 %v539, %v541
          %v543 = vrot.slane %v542, 2
          %v544 = vadd.f32 %v542, %v543
          %v545 = vrot.slane %v544, 1
          %v546 = vadd.f32 %v544, %v545
          %v547 = vrot.slane %v540, 4
          %v548 = vadd.f32 %v540, %v547
          %v549 = vrot.slane %v548, 2
          %v550 = vadd.f32 %v548, %v549
          %v551 = vrot.slane %v550, 1
          %v552 = vadd.f32 %v550, %v551
          %v553 = vmul.f32 %v546, %v534
          %v554 = vmul.f32 %v552, %v534
          %v555 = vadd.f32 %v553, 1e-05
          %v556 = vadd.f32 %v554, 1e-05
          %v557 = vrsqrt.pop %v555
          %v558 = vrsqrt.pop %v556
          %v559 = vmul.f32 %v537, %v557
          %v560 = vmul.f32 %v538, %v558
          %v561 = vld [vmem:[%s281] sm:$0x3]
          %v563 = vlaneseq
          %v564 = vshrl.u32 %v563, 7
          %v565 = vsub.s32 0, %v564
          %v566 = vrot.slane %v561, %v565
          %v567 = vlaneseq
          %v568 = vshrl.u32 %v567, 7
          %v569 = vsub.s32 1, %v568
          %v570 = vrot.slane %v561, %v569
          %v573 = vmul.f32 %v559, %v566
          %v574 = vmul.f32 %v560, %v570
          %v575 = vld [vmem:[%s327] sm:$0x3]
          %v577 = vlaneseq
          %v578 = vshrl.u32 %v577, 7
          %v579 = vsub.s32 0, %v578
          %v580 = vrot.slane %v575, %v579
          %v581 = vlaneseq
          %v582 = vshrl.u32 %v581, 7
          %v583 = vsub.s32 1, %v582
          %v584 = vrot.slane %v575, %v583
          %v587 = vadd.f32 %v573, %v580
          %v588 = vadd.f32 %v574, %v584
          %589 = vst [vmem:[%s319] sm:$0xff] %v587
          %590 = vst [vmem:[%s319 + $0x8] sm:$0xff] %v588
        $region56: #{tpu_custom_call.1} parent=35 // pred_fallthru
          _
        %s591 = sand.u32 %s150, 1
        %s592 = scalar_lea.sflag [#allocation5], %s591
        %s593 = sand.u32 %s150, 1
        %s594 = smul.addr %s593, 16
        %s595 = scalar_lea.vmem [#allocation9], %s594
        // Predicated region
        $region57: #{tpu_custom_call.1} parent=35 // pred_check
          %p596 = pneg %p160
        $region58: #{tpu_custom_call.1} parent=35 // pred_check_branch
          %598 = sbr.rel (%p596) target = $region60
        $region59: #{tpu_custom_call.1} parent=35 // pred_region
          %s599 = smul.u32 2, %s28
          %s601 = ssub.s32 256, 256
          %602 = vsyncadd %s592, %s601
          %s603 = smul.addr %s599, 128
          %s604 = scalar_lea.hbm %s4, %s603
          %s606 = sshll.u32 %s595, 4
          %s607 = int_to_ptr.vmem [resolvable:$true] %s606
          %609 = dma.vmem_to_hbm [thread:$0]  %s607, 256, %s604, %s592
        $region60: #{tpu_custom_call.1} parent=35 // pred_fallthru
          _
      $region36: #{tpu_custom_call.1} parent=5 // pred_fallthru
        _
      %p610 = scmp.le.s32.totalorder 2, %s19
      // Predicated region
      $region61: #{tpu_custom_call.1} parent=5 // pred_check
        %p611 = pneg %p610
      $region62: #{tpu_custom_call.1} parent=5 // pred_check_branch
        %613 = sbr.rel (%p611) target = $region64
      $region63: #{tpu_custom_call.1} parent=5 // pred_region
        %s614 = ssub.s32 %s19, 2
        // Predicated region
        $region65: #{tpu_custom_call.1} parent=63 // pred_check
          %p615 = pneg %p166
        $region66: #{tpu_custom_call.1} parent=63 // pred_check_branch
          %617 = sbr.rel (%p615) target = $region68
        $region67: #{tpu_custom_call.1} parent=63 // pred_region
          %s618 = sand.u32 %s151, 1
          %s619 = scalar_lea.sflag [#allocation5], %s618
          %s620 = sand.u32 %s151, 1
          %s621 = smul.addr %s620, 16
          %s622 = scalar_lea.vmem [#allocation9], %s621
          %623 = dma.done %s619, 256
        $region68: #{tpu_custom_call.1} parent=63 // pred_fallthru
          _
      $region64: #{tpu_custom_call.1} parent=5 // pred_fallthru
        _
    $region6: #{tpu_custom_call.1} parent=1 // loop_footer
      %s23 = sadd.s32 1, %s19
    $region7: #{tpu_custom_call.1} parent=1 // loop_footer_branch
      %18 = sbr.rel target = $region3
    $region8: #{tpu_custom_call.1} parent=1 // loop_exit
      _
    %624 = vsyncpa [#allocation4], 1
    %s625 = scalar_lea.sflag [#allocation4], 1
    %626 = vsyncpa %s625, 1
    %627 = vsyncpa [#allocation7], 1
    %s628 = scalar_lea.sflag [#allocation7], 1
    %629 = vsyncpa %s628, 1
    %630 = vsyncpa [#allocation5], 1
    %s631 = scalar_lea.sflag [#allocation5], 1
    %632 = vsyncpa %s631, 1

</llo_original>
